<compile_context>
chip_gen: v6e
topology: v6e:2x2x1
jax: 0.10.0
libtpu: 0.0.40
codegen_flags: <defaults>
</compile_context>

<pallas_src>
import functools

import jax
import jax.numpy as jnp
from jax import lax
from jax.experimental import pallas as pl
from jax.experimental.pallas import tpu as pltpu


def _arima_kernel(x_ref, o_ref, *, pred_len, l_valid):
    x = x_ref[...].astype(jnp.float32)               # (Lp, Nblk): time x series
    Lp = x.shape[0]

    t_idx = lax.broadcasted_iota(jnp.int32, x.shape, 0)   # row (time) index
    eps = jnp.float32(1e-8)

    # --- boundary levels via static single-row ref reads (load slot) -------
    x_first = x_ref[pl.ds(0, 1), :].astype(jnp.float32)            # (1, Nblk)
    x_last = x_ref[pl.ds(l_valid - 1, 1), :].astype(jnp.float32)
    x_lm1 = x_ref[pl.ds(l_valid - 2, 1), :].astype(jnp.float32)
    x_lm2 = x_ref[pl.ds(l_valid - 3, 1), :].astype(jnp.float32)

    # --- first difference (the "I", d = 1), kept at full (Lp, Nblk) shape --
    # roll by Lp-1 == roll by -1: x_next[t] = x[(t+1) % Lp]; wrap / padded
    # rows are zeroed by the valid mask.  pltpu.roll uses the XLU slot, so no
    # misaligned sublane-slice relayouts are needed anywhere.
    x_next = pltpu.roll(x, shift=Lp - 1, axis=0)
    valid = (t_idx < l_valid - 1).astype(jnp.float32)       # rows 0..L-2 valid
    d = (x_next - x) * valid                                # d[t]=x[t+1]-x[t]

    # Mean of the differenced series telescopes: sum(d) = x[L-1] - x[0].
    n = jnp.float32(l_valid - 1)
    mu = (x_last - x_first) / n                             # (1, Nblk)

    # Centered differences.  Invalid / padded rows are exactly zero; the
    # dc_m1 wrap row below relies on dc[Lp-1] == 0 (guaranteed by `valid`).
    dc = (d - mu) * valid
    dc_m1 = pltpu.roll(dc, shift=1, axis=0)                 # dc_m1[t] = dc[t-1]
    dc_m2 = pltpu.roll(dc, shift=2, axis=0)                 # dc_m2[t] = dc[t-2]

    # --- autocovariances: contract over time on the (idle) MXU -------------
    ones_t = jnp.ones((1, Lp), jnp.float32)
    gamma0 = jnp.dot(ones_t, dc * dc, preferred_element_type=jnp.float32)
    gamma1 = jnp.dot(ones_t, dc * dc_m1, preferred_element_type=jnp.float32)
    gamma2 = jnp.dot(ones_t, jnp.where(t_idx >= 2, dc * dc_m2, 0.0),
                     preferred_element_type=jnp.float32)

    # --- Yule-Walker AR(2) coefficients ------------------------------------
    safe0 = jnp.where(gamma0 > eps, gamma0, jnp.float32(1.0))
    r1 = jnp.where(gamma0 > eps, gamma1 / safe0, jnp.float32(0.0))
    r2 = jnp.where(gamma0 > eps, gamma2 / safe0, jnp.float32(0.0))

    den = jnp.float32(1.0) - r1 * r1
    safe_den = jnp.where(jnp.abs(den) > eps, den, jnp.float32(1.0))
    phi1 = jnp.where(jnp.abs(den) > eps, r1 * (1.0 - r2) / safe_den, 0.0)
    phi2 = jnp.where(jnp.abs(den) > eps, (r2 - r1 * r1) / safe_den, 0.0)

    # Stationarity clamp: |phi2| < 1 and phi2 - 1 < phi1 < 1 - phi2, so the
    # unrolled recursion cannot blow up for adversarial inputs.
    phi2 = jnp.clip(phi2, -0.99, 0.99)
    bound = (jnp.float32(1.0) - phi2) * jnp.float32(0.999)
    phi1 = jnp.clip(phi1, -bound, bound)

    prev1 = x_last - x_lm1            # last differenced value
    prev2 = x_lm1 - x_lm2             # second-to-last
    last = x_last                     # last observed level

    # --- recursive forecast on differences, integrate back to levels -------
    # pred_len is static; the recursion is a true serial dependence.  Rows
    # are flushed in groups of <= 8 sublanes to bound live vregs.
    for g0 in range(0, pred_len, 8):
        gsz = min(8, pred_len - g0)
        rows = []
        for _ in range(gsz):
            dhat = mu + phi1 * (prev1 - mu) + phi2 * (prev2 - mu)
            last = last + dhat
            rows.append(last)
            prev2 = prev1
            prev1 = dhat
        o_ref[pl.ds(g0, gsz), :] = (
            jnp.concatenate(rows, axis=0).astype(o_ref.dtype))


def _round_up(v, m):
    return -(-v // m) * m


def _tpu_topology():
    """(num_tensorcores, physical_vmem_bytes), conservative fallbacks."""
    num_cores = 1
    vmem_bytes = 64 * 1024 * 1024        # v7x-safe default
    try:
        info = pltpu.get_tpu_info()
        vb = getattr(info, "vmem_capacity_bytes", None)
        if isinstance(vb, int) and vb > 0:
            vmem_bytes = vb
        for name in ("num_cores", "num_tensorcores", "core_count",
                     "tensorcores_per_chip"):
            val = getattr(info, name, None)
            if isinstance(val, int) and val > 0:
                num_cores = val
                break
    except Exception:
        pass
    return num_cores, vmem_bytes


def arima_forward(x, pred_len):
    """x: [B, L, C] -> forecast [B, pred_len, C] (float32)."""
    B, L, C = x.shape
    assert L >= 4, "ARIMA(2,1,0) fit needs at least 4 timesteps"
    N = B * C

    # Fold batch+channel onto the lane axis: (L, B*C), time on sublanes.
    # TODO(synk): accepting/producing the [L, B*C] layout upstream would
    # remove this HBM relayout (and its inverse) entirely.
    xt = jnp.transpose(x, (1, 0, 2)).reshape(L, N)
    if not jnp.issubdtype(xt.dtype, jnp.floating):
        xt = xt.astype(jnp.float32)      # narrow float dtypes are DMA'd as-is

    # Keep the time axis (sublanes) 8-aligned for clean roll/reduce codegen.
    Lp = _round_up(L, 8)

    # --- per-generation, VMEM-budget-driven lane tiling ---------------------
    num_cores, phys_vmem = _tpu_topology()
    scoped_vmem = min(32 * 1024 * 1024, phys_vmem // 2)
    # double-buffered in/out plus ~12 live (Lp, lane) f32 intermediates
    bytes_per_lane = 4 * (2 * (Lp + pred_len) + 12 * Lp)
    max_lanes = max(128, ((scoped_vmem // 2) // bytes_per_lane) // 128 * 128)

    steps = -(-N // max_lanes)                         # minimum VMEM-fitting steps
    if num_cores > 1 and N >= 128 * num_cores:
        # give every TensorCore at least one lane block (megacore / v7x)
        steps = _round_up(max(steps, num_cores), num_cores)

    if steps == 1:
        lane_block, n_pad = N, N        # full-dim block: no lane padding at all
    else:
        lane_block = _round_up(-(-N // steps), 128)
        n_pad = steps * lane_block

    pad_t, pad_n = Lp - L, n_pad - N
    if pad_t or pad_n:
        xt = jnp.pad(xt, ((0, pad_t), (0, pad_n)))     # zero series -> zero forecast

    kernel = functools.partial(_arima_kernel, pred_len=pred_len, l_valid=L)
    cost = pl.CostEstimate(
        flops=int((20 * Lp + 8 * pred_len) * n_pad),
        transcendentals=0,
        bytes_accessed=int(4 * (Lp + pred_len) * n_pad),
    )

    out = pl.pallas_call(
        kernel,
        out_shape=jax.ShapeDtypeStruct((pred_len, n_pad), jnp.float32),
        grid_spec=pltpu.PrefetchScalarGridSpec(
            num_scalar_prefetch=0,
            grid=(steps,),
            in_specs=[pl.BlockSpec((Lp, lane_block), lambda j: (0, j))],
            out_specs=pl.BlockSpec((pred_len, lane_block), lambda j: (0, j)),
        ),
        compiler_params=pltpu.CompilerParams(
            dimension_semantics=("parallel",),
            vmem_limit_bytes=scoped_vmem,
        ),
        cost_estimate=cost,
    )(xt)

    # Unfold: (pred_len, B*C) -> (B, pred_len, C).
    if n_pad != N:
        out = out[:, :N]
    out = out.reshape(pred_len, B, C)
    return jnp.transpose(out, (1, 0, 2))


if __name__ == "__main__":
    # Small shapes consistent with the module: batch=2, seq_len=16, channels=8.
    B, L, C = 2, 16, 8
    pred_len = 8

    key = jax.random.PRNGKey(0)
    k1, k2 = jax.random.split(key)
    # Mildly trending + noisy multi-channel series, deterministic.
    trend = jnp.linspace(0.0, 1.0, L)[None, :, None] * (
        1.0 + jax.random.uniform(k1, (B, 1, C)))
    noise = 0.1 * jax.random.normal(k2, (B, L, C))
    x = (trend + noise).astype(jnp.float32)

    out = arima_forward(x, pred_len)
    jax.block_until_ready(out)

    assert out.shape == (B, pred_len, C), out.shape
    assert bool(jnp.all(jnp.isfinite(out)))
    print("KERNEL_OK")
</pallas_src>

<mosaic_0001>
module attributes {stable_mosaic.version = 11 : i64} {
  func.func @_arima_kernel(%arg0: i32, %arg1: memref<16x16xf32, #tpu.memory_space<vmem>>, %arg2: memref<8x16xf32, #tpu.memory_space<vmem>>) attributes {dimension_semantics = [#tpu.dimension_semantics<parallel>], iteration_bounds = array<i64: 1>, scalar_prefetch = 0 : i64, scratch_operands = 0 : i64, tpu.core_type = #tpu.core_type<tc>, window_params = [{transform_indices = @transform_0, window_bounds = array<i64: 16, 16>}, {transform_indices = @transform_1, window_bounds = array<i64: 8, 16>}]} {
    %c0 = arith.constant 0 : index
    %c0_0 = arith.constant 0 : index
    %0 = vector.load %arg1[%c0, %c0_0] : memref<16x16xf32, #tpu.memory_space<vmem>>, vector<16x16xf32>
    %1 = tpu.iota {dimensions = array<i32: 0>} : vector<16x16xi32>
    %c0_1 = arith.constant 0 : index
    %c0_2 = arith.constant 0 : index
    %2 = vector.load %arg1[%c0_1, %c0_2] : memref<16x16xf32, #tpu.memory_space<vmem>>, vector<1x16xf32>
    %c15 = arith.constant 15 : index
    %c0_3 = arith.constant 0 : index
    %3 = vector.load %arg1[%c15, %c0_3] : memref<16x16xf32, #tpu.memory_space<vmem>>, vector<1x16xf32>
    %c14 = arith.constant 14 : index
    %c0_4 = arith.constant 0 : index
    %4 = vector.load %arg1[%c14, %c0_4] : memref<16x16xf32, #tpu.memory_space<vmem>>, vector<1x16xf32>
    %c13 = arith.constant 13 : index
    %c0_5 = arith.constant 0 : index
    %5 = vector.load %arg1[%c13, %c0_5] : memref<16x16xf32, #tpu.memory_space<vmem>>, vector<1x16xf32>
    %c15_i32 = arith.constant 15 : i32
    %6 = tpu.dynamic_rotate %0 by %c15_i32 dim 0 : vector<16x16xf32>, i32 -> vector<16x16xf32>
    %c15_i32_6 = arith.constant 15 : i32
    %7 = vector.broadcast %c15_i32_6 : i32 to vector<16x16xi32>
    %8 = arith.cmpi slt, %1, %7 : vector<16x16xi32>
    %9 = arith.extui %8 : vector<16x16xi1> to vector<16x16xi32>
    %10 = arith.sitofp %9 : vector<16x16xi32> to vector<16x16xf32>
    %11 = arith.subf %6, %0 : vector<16x16xf32>
    %12 = arith.mulf %11, %10 : vector<16x16xf32>
    %13 = arith.subf %3, %2 : vector<1x16xf32>
    %cst = arith.constant 1.500000e+01 : f32
    %14 = vector.broadcast %cst : f32 to vector<1x16xf32>
    %15 = arith.divf %13, %14 : vector<1x16xf32>
    %16 = vector.broadcast %15 : vector<1x16xf32> to vector<16x16xf32>
    %17 = arith.subf %12, %16 : vector<16x16xf32>
    %18 = arith.mulf %17, %10 : vector<16x16xf32>
    %c1_i32 = arith.constant 1 : i32
    %19 = tpu.dynamic_rotate %18 by %c1_i32 dim 0 : vector<16x16xf32>, i32 -> vector<16x16xf32>
    %c2_i32 = arith.constant 2 : i32
    %20 = tpu.dynamic_rotate %18 by %c2_i32 dim 0 : vector<16x16xf32>, i32 -> vector<16x16xf32>
    %cst_7 = arith.constant 1.000000e+00 : f32
    %21 = vector.broadcast %cst_7 : f32 to vector<1x16xf32>
    %22 = arith.mulf %18, %18 : vector<16x16xf32>
    %cst_8 = arith.constant dense<0.000000e+00> : vector<1x16xf32>
    %23 = tpu.matmul %21, %22, %cst_8 {dimension_numbers = #tpu.dot_dimension_numbers<[1], [0], [0], [1], [0, 0, 1, 1], [], []>} : vector<1x16xf32>, vector<16x16xf32>, vector<1x16xf32> -> vector<1x16xf32>
    %24 = arith.mulf %18, %19 : vector<16x16xf32>
    %cst_9 = arith.constant dense<0.000000e+00> : vector<1x16xf32>
    %25 = tpu.matmul %21, %24, %cst_9 {dimension_numbers = #tpu.dot_dimension_numbers<[1], [0], [0], [1], [0, 0, 1, 1], [], []>} : vector<1x16xf32>, vector<16x16xf32>, vector<1x16xf32> -> vector<1x16xf32>
    %c2_i32_10 = arith.constant 2 : i32
    %26 = vector.broadcast %c2_i32_10 : i32 to vector<16x16xi32>
    %27 = arith.cmpi sge, %1, %26 : vector<16x16xi32>
    %28 = arith.mulf %18, %20 : vector<16x16xf32>
    %cst_11 = arith.constant 0.000000e+00 : f32
    %29 = vector.broadcast %cst_11 : f32 to vector<16x16xf32>
    %30 = arith.select %27, %28, %29 : vector<16x16xi1>, vector<16x16xf32>
    %cst_12 = arith.constant dense<0.000000e+00> : vector<1x16xf32>
    %31 = tpu.matmul %21, %30, %cst_12 {dimension_numbers = #tpu.dot_dimension_numbers<[1], [0], [0], [1], [0, 0, 1, 1], [], []>} : vector<1x16xf32>, vector<16x16xf32>, vector<1x16xf32> -> vector<1x16xf32>
    %cst_13 = arith.constant 9.99999993E-9 : f32
    %32 = vector.broadcast %cst_13 : f32 to vector<1x16xf32>
    %33 = arith.cmpf ogt, %23, %32 : vector<1x16xf32>
    %cst_14 = arith.constant 1.000000e+00 : f32
    %34 = vector.broadcast %cst_14 : f32 to vector<1x16xf32>
    %35 = arith.select %33, %23, %34 : vector<1x16xi1>, vector<1x16xf32>
    %cst_15 = arith.constant 9.99999993E-9 : f32
    %36 = vector.broadcast %cst_15 : f32 to vector<1x16xf32>
    %37 = arith.cmpf ogt, %23, %36 : vector<1x16xf32>
    %38 = arith.divf %25, %35 : vector<1x16xf32>
    %cst_16 = arith.constant 0.000000e+00 : f32
    %39 = vector.broadcast %cst_16 : f32 to vector<1x16xf32>
    %40 = arith.select %37, %38, %39 : vector<1x16xi1>, vector<1x16xf32>
    %cst_17 = arith.constant 9.99999993E-9 : f32
    %41 = vector.broadcast %cst_17 : f32 to vector<1x16xf32>
    %42 = arith.cmpf ogt, %23, %41 : vector<1x16xf32>
    %43 = arith.divf %31, %35 : vector<1x16xf32>
    %cst_18 = arith.constant 0.000000e+00 : f32
    %44 = vector.broadcast %cst_18 : f32 to vector<1x16xf32>
    %45 = arith.select %42, %43, %44 : vector<1x16xi1>, vector<1x16xf32>
    %46 = arith.mulf %40, %40 : vector<1x16xf32>
    %cst_19 = arith.constant 1.000000e+00 : f32
    %47 = vector.broadcast %cst_19 : f32 to vector<1x16xf32>
    %48 = arith.subf %47, %46 : vector<1x16xf32>
    %49 = math.absf %48 : vector<1x16xf32>
    %cst_20 = arith.constant 9.99999993E-9 : f32
    %50 = vector.broadcast %cst_20 : f32 to vector<1x16xf32>
    %51 = arith.cmpf ogt, %49, %50 : vector<1x16xf32>
    %cst_21 = arith.constant 1.000000e+00 : f32
    %52 = vector.broadcast %cst_21 : f32 to vector<1x16xf32>
    %53 = arith.select %51, %48, %52 : vector<1x16xi1>, vector<1x16xf32>
    %54 = math.absf %48 : vector<1x16xf32>
    %cst_22 = arith.constant 9.99999993E-9 : f32
    %55 = vector.broadcast %cst_22 : f32 to vector<1x16xf32>
    %56 = arith.cmpf ogt, %54, %55 : vector<1x16xf32>
    %cst_23 = arith.constant 1.000000e+00 : f32
    %57 = vector.broadcast %cst_23 : f32 to vector<1x16xf32>
    %58 = arith.subf %57, %45 : vector<1x16xf32>
    %59 = arith.mulf %40, %58 : vector<1x16xf32>
    %60 = arith.divf %59, %53 : vector<1x16xf32>
    %cst_24 = arith.constant 0.000000e+00 : f32
    %61 = vector.broadcast %cst_24 : f32 to vector<1x16xf32>
    %62 = arith.select %56, %60, %61 : vector<1x16xi1>, vector<1x16xf32>
    %63 = math.absf %48 : vector<1x16xf32>
    %cst_25 = arith.constant 9.99999993E-9 : f32
    %64 = vector.broadcast %cst_25 : f32 to vector<1x16xf32>
    %65 = arith.cmpf ogt, %63, %64 : vector<1x16xf32>
    %66 = arith.mulf %40, %40 : vector<1x16xf32>
    %67 = arith.subf %45, %66 : vector<1x16xf32>
    %68 = arith.divf %67, %53 : vector<1x16xf32>
    %cst_26 = arith.constant 0.000000e+00 : f32
    %69 = vector.broadcast %cst_26 : f32 to vector<1x16xf32>
    %70 = arith.select %65, %68, %69 : vector<1x16xi1>, vector<1x16xf32>
    %cst_27 = arith.constant -9.900000e-01 : f32
    %cst_28 = arith.constant 9.900000e-01 : f32
    %71 = vector.broadcast %cst_27 : f32 to vector<1x16xf32>
    %72 = arith.maximumf %71, %70 : vector<1x16xf32>
    %73 = vector.broadcast %cst_28 : f32 to vector<1x16xf32>
    %74 = arith.minimumf %73, %72 : vector<1x16xf32>
    %cst_29 = arith.constant 1.000000e+00 : f32
    %75 = vector.broadcast %cst_29 : f32 to vector<1x16xf32>
    %76 = arith.subf %75, %74 : vector<1x16xf32>
    %cst_30 = arith.constant 9.990000e-01 : f32
    %77 = vector.broadcast %cst_30 : f32 to vector<1x16xf32>
    %78 = arith.mulf %76, %77 : vector<1x16xf32>
    %cst_31 = arith.constant 0.000000e+00 : f32
    %79 = vector.broadcast %cst_31 : f32 to vector<1x16xf32>
    %80 = arith.subf %79, %78 : vector<1x16xf32>
    %81 = arith.maximumf %80, %62 : vector<1x16xf32>
    %82 = arith.minimumf %78, %81 : vector<1x16xf32>
    %83 = arith.subf %3, %4 : vector<1x16xf32>
    %84 = arith.subf %4, %5 : vector<1x16xf32>
    %85 = arith.subf %83, %15 : vector<1x16xf32>
    %86 = arith.mulf %82, %85 : vector<1x16xf32>
    %87 = arith.addf %15, %86 : vector<1x16xf32>
    %88 = arith.subf %84, %15 : vector<1x16xf32>
    %89 = arith.mulf %74, %88 : vector<1x16xf32>
    %90 = arith.addf %87, %89 : vector<1x16xf32>
    %91 = arith.addf %3, %90 : vector<1x16xf32>
    %92 = arith.subf %90, %15 : vector<1x16xf32>
    %93 = arith.mulf %82, %92 : vector<1x16xf32>
    %94 = arith.addf %15, %93 : vector<1x16xf32>
    %95 = arith.subf %83, %15 : vector<1x16xf32>
    %96 = arith.mulf %74, %95 : vector<1x16xf32>
    %97 = arith.addf %94, %96 : vector<1x16xf32>
    %98 = arith.addf %91, %97 : vector<1x16xf32>
    %99 = arith.subf %97, %15 : vector<1x16xf32>
    %100 = arith.mulf %82, %99 : vector<1x16xf32>
    %101 = arith.addf %15, %100 : vector<1x16xf32>
    %102 = arith.subf %90, %15 : vector<1x16xf32>
    %103 = arith.mulf %74, %102 : vector<1x16xf32>
    %104 = arith.addf %101, %103 : vector<1x16xf32>
    %105 = arith.addf %98, %104 : vector<1x16xf32>
    %106 = arith.subf %104, %15 : vector<1x16xf32>
    %107 = arith.mulf %82, %106 : vector<1x16xf32>
    %108 = arith.addf %15, %107 : vector<1x16xf32>
    %109 = arith.subf %97, %15 : vector<1x16xf32>
    %110 = arith.mulf %74, %109 : vector<1x16xf32>
    %111 = arith.addf %108, %110 : vector<1x16xf32>
    %112 = arith.addf %105, %111 : vector<1x16xf32>
    %113 = arith.subf %111, %15 : vector<1x16xf32>
    %114 = arith.mulf %82, %113 : vector<1x16xf32>
    %115 = arith.addf %15, %114 : vector<1x16xf32>
    %116 = arith.subf %104, %15 : vector<1x16xf32>
    %117 = arith.mulf %74, %116 : vector<1x16xf32>
    %118 = arith.addf %115, %117 : vector<1x16xf32>
    %119 = arith.addf %112, %118 : vector<1x16xf32>
    %120 = arith.subf %118, %15 : vector<1x16xf32>
    %121 = arith.mulf %82, %120 : vector<1x16xf32>
    %122 = arith.addf %15, %121 : vector<1x16xf32>
    %123 = arith.subf %111, %15 : vector<1x16xf32>
    %124 = arith.mulf %74, %123 : vector<1x16xf32>
    %125 = arith.addf %122, %124 : vector<1x16xf32>
    %126 = arith.addf %119, %125 : vector<1x16xf32>
    %127 = arith.subf %125, %15 : vector<1x16xf32>
    %128 = arith.mulf %82, %127 : vector<1x16xf32>
    %129 = arith.addf %15, %128 : vector<1x16xf32>
    %130 = arith.subf %118, %15 : vector<1x16xf32>
    %131 = arith.mulf %74, %130 : vector<1x16xf32>
    %132 = arith.addf %129, %131 : vector<1x16xf32>
    %133 = arith.addf %126, %132 : vector<1x16xf32>
    %134 = arith.subf %132, %15 : vector<1x16xf32>
    %135 = arith.mulf %82, %134 : vector<1x16xf32>
    %136 = arith.addf %15, %135 : vector<1x16xf32>
    %137 = arith.subf %125, %15 : vector<1x16xf32>
    %138 = arith.mulf %74, %137 : vector<1x16xf32>
    %139 = arith.addf %136, %138 : vector<1x16xf32>
    %140 = arith.addf %133, %139 : vector<1x16xf32>
    %141 = tpu.concatenate %91, %98, %105, %112, %119, %126, %133, %140 in 0 : vector<1x16xf32>, vector<1x16xf32>, vector<1x16xf32>, vector<1x16xf32>, vector<1x16xf32>, vector<1x16xf32>, vector<1x16xf32>, vector<1x16xf32> -> vector<8x16xf32>
    %c0_32 = arith.constant 0 : index
    %c0_33 = arith.constant 0 : index
    %142 = vector.load %arg2[%c0_32, %c0_33] : memref<8x16xf32, #tpu.memory_space<vmem>>, vector<8x16xf32>
    tpu.vector_store %arg2[%c0_32, %c0_33], %141 {strides = array<i32>} : memref<8x16xf32, #tpu.memory_space<vmem>>, vector<8x16xf32>,
    return
  }
  func.func @transform_0(%arg0: i32) -> (i32, i32) {
    %c0_i32 = arith.constant 0 : i32
    %c0_i32_0 = arith.constant 0 : i32
    return %c0_i32, %arg0 : i32, i32
  }
  func.func @transform_1(%arg0: i32) -> (i32, i32) {
    %c0_i32 = arith.constant 0 : i32
    %c0_i32_0 = arith.constant 0 : i32
    return %c0_i32, %arg0 : i32, i32
  }
}

</mosaic_0001>

<llo_original>
// kernel: tpu_custom_call.1
$region0: #{tpu_custom_call.1}
  #allocation0 [shape = 'u32[]', space=smem, size = 0x4, offset = 0x4, fixed_abs, tag = 'smem constant byte address 0x4 - core index']
  #allocation1 [shape = 'u32[144,128]{1,0:T(1,128)}', space=vmem, size = 0x12000, scoped, tag = 'internal scratch']
  %s0 = inlined_call_operand.hbm [shape: f32[16,16], index: 0, kind: input, shape index: {}]
  %s1 = inlined_call_operand.hbm [shape: f32[8,16], index: 1, kind: output, shape index: {}]
  %s2 = sld [smem:[#allocation0]]
  $region18: #{tpu_custom_call.1} parent=0
    _
  %s4 = ssub.s32 1, %s2
  %s5 = scalar_select 0, %s4, %s2
  $region1: #{tpu_custom_call.1} parent=0
    #allocation2 [shape = 'u8[8192]{0}', space=vmem, size = 0x2000, scoped, tag = 'input window, operand 0, single buffered']
    #allocation3 [shape = 's32[1]{0}', space=sflag, size = 0x4, scoped, tag = 'scoped memory for tpu_custom_call.1']
    #allocation4 [shape = 's32[1]{0}', space=sflag, size = 0x4, scoped, tag = 'scoped memory for tpu_custom_call.1']
    #allocation5 [shape = 'u8[4096]{0}', space=vmem, size = 0x1000, scoped, tag = 'output window, operand 0, single buffered']
    %6 = vsyncpa [#allocation3], 0
    %7 = vsyncpa [#allocation4], 0
    // Predicated region
    $region2: #{tpu_custom_call.1} parent=1 // pred_check
      _
    $region3: #{tpu_custom_call.1} parent=1 // pred_check_branch
      %9 = sbr.rel (0) target = $region5
    $region4: #{tpu_custom_call.1} parent=1 // pred_region
      %s11 = ssub.s32 256, 256
      %12 = vsyncadd [#allocation3], %s11
      %s13 = sshll.u32 [#allocation2], 4
      %s14 = int_to_ptr.vmem [resolvable:$true] %s13
      %19 = dma.hbm_to_vmem [thread:$0]  %s0, 256, %s14, [#allocation3], 128, 128, 8
    $region5: #{tpu_custom_call.1} parent=1 // pred_fallthru
      _
    // Predicated region
    $region6: #{tpu_custom_call.1} parent=1 // pred_check
      _
    $region7: #{tpu_custom_call.1} parent=1 // pred_check_branch
      %21 = sbr.rel (0) target = $region9
    $region8: #{tpu_custom_call.1} parent=1 // pred_region
      %22 = dma.done [#allocation3], 256
    $region9: #{tpu_custom_call.1} parent=1 // pred_fallthru
      _
    %v23 = vld [vmem:[#allocation2] sm:$0xff]
    %v24 = vld [vmem:[#allocation2 + $0x8] sm:$0xff]
    %v25 = vlaneseq
    %v26 = vshrl.u32 %v25, 7
    %v27 = vadd.s32 %v26, 8
    %v28 = vld [vmem:[#allocation2] sm:$0x1]
    %v29 = vld [vmem:[#allocation2 + $0xf] sm:$0x1]
    %v30 = vld [vmem:[#allocation2 + $0xe] sm:$0x1]
    %v31 = vld [vmem:[#allocation2 + $0xd] sm:$0x1]
    %v32 = vrot.slane %v23, 1
    %v33 = vrot.slane %v24, 1
    %vm34 = vcmp.lt.s32.totalorder %v26, 7
    %v35 = vsel %vm34, %v32, %v33
    %v36 = vsel %vm34, %v33, %v32
    %vm37 = vcmp.lt.s32.totalorder %v26, 15
    %vm38 = vcmp.lt.s32.totalorder %v27, 15
    %v39 = vsel %vm37, 1, 0
    %v40 = vsel %vm38, 1, 0
    %v41 = vcvt.s32.f32 %v39
    %v42 = vcvt.s32.f32 %v40
    %v43 = vsub.f32 %v35, %v23
    %v44 = vsub.f32 %v36, %v24
    %v45 = vmul.f32 %v43, %v41
    %v46 = vmul.f32 %v44, %v42
    %v47 = vsub.f32 %v29, %v28
    %v48 = vrcp.pop 15.0
    %v49 = vmul.f32 %v47, %v48
    %v50 = vlaneseq
    %v51 = vshrl.u32 %v50, 7
    %v52 = vsub.s32 0, %v51
    %v53 = vrot.slane %v49, %v52
    %v54 = vsub.f32 %v45, %v53
    %v55 = vsub.f32 %v46, %v53
    %v56 = vmul.f32 %v54, %v41
    %v57 = vmul.f32 %v55, %v42
    %v58 = vrot.slane %v56, 7
    %v59 = vrot.slane %v57, 7
    %vm60 = vcmp.lt.s32.totalorder %v26, 1
    %v61 = vsel %vm60, %v58, %v59
    %v62 = vsel %vm60, %v59, %v58
    %v63 = vrot.slane %v56, 6
    %v64 = vrot.slane %v57, 6
    %vm65 = vcmp.lt.s32.totalorder %v26, 2
    %v66 = vsel %vm65, %v63, %v64
    %v67 = vsel %vm65, %v64, %v63
    %v68 = vmul.f32 %v56, %v56
    %v69 = vmul.f32 %v57, %v57
    %vm70 = vcmask 130048
    %v72 = vsel %vm70, 1.0, 0
    %74 = vmatprep.subr.mxu0 0.0
    %75 = vmatpush1.msra.mxu0 0.0
    %76 = vmatprep.subr.mxu0 0.0
    %77 = vmatpush1.msra.mxu0 0.0
    %78 = vmatprep.subr.mxu0 0.0
    %79 = vmatpush1.msra.mxu0 0.0
    %80 = vmatprep.subr.mxu0 0.0
    %81 = vmatpush1.msra.mxu0 0.0
    %82 = vmatprep.subr.mxu0 0.0
    %83 = vmatpush1.msra.mxu0 0.0
    %84 = vmatprep.subr.mxu0 0.0
    %85 = vmatpush1.msra.mxu0 0.0
    %86 = vmatprep.subr.mxu0 0.0
    %87 = vmatpush1.msra.mxu0 0.0
    %88 = vmatprep.subr.mxu0 0.0
    %89 = vmatpush1.msra.mxu0 0.0
    %90 = vmatprep.subr.mxu0 0.0
    %91 = vmatpush1.msra.mxu0 0.0
    %92 = vmatprep.subr.mxu0 0.0
    %93 = vmatpush1.msra.mxu0 0.0
    %94 = vmatprep.subr.mxu0 0.0
    %95 = vmatpush1.msra.mxu0 0.0
    %96 = vmatprep.subr.mxu0 0.0
    %97 = vmatpush1.msra.mxu0 0.0
    %98 = vmatprep.subr.mxu0 0.0
    %99 = vmatpush1.msra.mxu0 0.0
    %100 = vmatprep.subr.mxu0 0.0
    %101 = vmatpush1.msra.mxu0 0.0
    %102 = vmatprep.subr.mxu0 0.0
    %103 = vmatpush1.msra.mxu0 %v69
    %104 = vmatprep.subr.mxu0 0.0
    %105 = vmatpush1.msra.mxu0 %v68
    %106 = vmatprep.subr.mxu0 0.0
    %107 = vmatpush2.msra.mxu0 0.0
    %108 = vmatprep.subr.mxu0 0.0
    %109 = vmatpush2.msra.mxu0 0.0
    %110 = vmatprep.subr.mxu0 0.0
    %111 = vmatpush2.msra.mxu0 0.0
    %112 = vmatprep.subr.mxu0 0.0
    %113 = vmatpush2.msra.mxu0 0.0
    %114 = vmatprep.subr.mxu0 0.0
    %115 = vmatpush2.msra.mxu0 0.0
    %116 = vmatprep.subr.mxu0 0.0
    %117 = vmatpush2.msra.mxu0 0.0
    %118 = vmatprep.subr.mxu0 0.0
    %119 = vmatpush2.msra.mxu0 0.0
    %120 = vmatprep.subr.mxu0 0.0
    %121 = vmatpush2.msra.mxu0 0.0
    %122 = vmatprep.subr.mxu0 0.0
    %123 = vmatpush2.msra.mxu0 0.0
    %124 = vmatprep.subr.mxu0 0.0
    %125 = vmatpush2.msra.mxu0 0.0
    %126 = vmatprep.subr.mxu0 0.0
    %127 = vmatpush2.msra.mxu0 0.0
    %128 = vmatprep.subr.mxu0 0.0
    %129 = vmatpush2.msra.mxu0 0.0
    %130 = vmatprep.subr.mxu0 0.0
    %131 = vmatpush2.msra.mxu0 0.0
    %132 = vmatprep.subr.mxu0 0.0
    %133 = vmatpush2.msra.mxu0 0.0
    %134 = vmatprep.subr.mxu0 0.0
    %135 = vmatpush2.msra.mxu0 0.0
    %136 = vmatprep.subr.mxu0 0.0
    %137 = vmatpush2.msra.mxu0 0.0
    %138 = vmatprep.mubr.f32.mxu0 0.0
    %139 = vmatmul.mubr.f32.gmra.mxu0 %v72
    %v140 = vpop.f32.mrf.mxu0
    %v141 = vadd.f32 0.0, %v140
    %v142 = vpop.f32.mrf.mxu0
    %143 = vdwg.mxu0
    %v144 = vmul.f32 %v56, %v62
    %v145 = vmul.f32 %v57, %v61
    %146 = vmatprep.subr.mxu0 0.0
    %147 = vmatpush1.msra.mxu0 0.0
    %148 = vmatprep.subr.mxu0 0.0
    %149 = vmatpush1.msra.mxu0 0.0
    %150 = vmatprep.subr.mxu0 0.0
    %151 = vmatpush1.msra.mxu0 0.0
    %152 = vmatprep.subr.mxu0 0.0
    %153 = vmatpush1.msra.mxu0 0.0
    %154 = vmatprep.subr.mxu0 0.0
    %155 = vmatpush1.msra.mxu0 0.0
    %156 = vmatprep.subr.mxu0 0.0
    %157 = vmatpush1.msra.mxu0 0.0
    %158 = vmatprep.subr.mxu0 0.0
    %159 = vmatpush1.msra.mxu0 0.0
    %160 = vmatprep.subr.mxu0 0.0
    %161 = vmatpush1.msra.mxu0 0.0
    %162 = vmatprep.subr.mxu0 0.0
    %163 = vmatpush1.msra.mxu0 0.0
    %164 = vmatprep.subr.mxu0 0.0
    %165 = vmatpush1.msra.mxu0 0.0
    %166 = vmatprep.subr.mxu0 0.0
    %167 = vmatpush1.msra.mxu0 0.0
    %168 = vmatprep.subr.mxu0 0.0
    %169 = vmatpush1.msra.mxu0 0.0
    %170 = vmatprep.subr.mxu0 0.0
    %171 = vmatpush1.msra.mxu0 0.0
    %172 = vmatprep.subr.mxu0 0.0
    %173 = vmatpush1.msra.mxu0 0.0
    %174 = vmatprep.subr.mxu0 0.0
    %175 = vmatpush1.msra.mxu0 %v145
    %176 = vmatprep.subr.mxu0 0.0
    %177 = vmatpush1.msra.mxu0 %v144
    %178 = vmatprep.subr.mxu0 0.0
    %179 = vmatpush2.msra.mxu0 0.0
    %180 = vmatprep.subr.mxu0 0.0
    %181 = vmatpush2.msra.mxu0 0.0
    %182 = vmatprep.subr.mxu0 0.0
    %183 = vmatpush2.msra.mxu0 0.0
    %184 = vmatprep.subr.mxu0 0.0
    %185 = vmatpush2.msra.mxu0 0.0
    %186 = vmatprep.subr.mxu0 0.0
    %187 = vmatpush2.msra.mxu0 0.0
    %188 = vmatprep.subr.mxu0 0.0
    %189 = vmatpush2.msra.mxu0 0.0
    %190 = vmatprep.subr.mxu0 0.0
    %191 = vmatpush2.msra.mxu0 0.0
    %192 = vmatprep.subr.mxu0 0.0
    %193 = vmatpush2.msra.mxu0 0.0
    %194 = vmatprep.subr.mxu0 0.0
    %195 = vmatpush2.msra.mxu0 0.0
    %196 = vmatprep.subr.mxu0 0.0
    %197 = vmatpush2.msra.mxu0 0.0
    %198 = vmatprep.subr.mxu0 0.0
    %199 = vmatpush2.msra.mxu0 0.0
    %200 = vmatprep.subr.mxu0 0.0
    %201 = vmatpush2.msra.mxu0 0.0
    %202 = vmatprep.subr.mxu0 0.0
    %203 = vmatpush2.msra.mxu0 0.0
    %204 = vmatprep.subr.mxu0 0.0
    %205 = vmatpush2.msra.mxu0 0.0
    %206 = vmatprep.subr.mxu0 0.0
    %207 = vmatpush2.msra.mxu0 0.0
    %208 = vmatprep.subr.mxu0 0.0
    %209 = vmatpush2.msra.mxu0 0.0
    %210 = vmatprep.mubr.f32.mxu0 0.0
    %211 = vmatmul.mubr.f32.gmra.mxu0 %v72
    %v212 = vpop.f32.mrf.mxu0
    %v213 = vadd.f32 0.0, %v212
    %v214 = vpop.f32.mrf.mxu0
    %215 = vdwg.mxu0
    %vm216 = vcmp.ge.s32.totalorder %v26, 2
    %vm217 = vcmp.ge.s32.totalorder %v27, 2
    %v218 = vmul.f32 %v56, %v67
    %v219 = vmul.f32 %v57, %v66
    %v220 = vsel %vm216, %v218, 0.0
    %v221 = vsel %vm217, %v219, 0.0
    %222 = vmatprep.subr.mxu0 0.0
    %223 = vmatpush1.msra.mxu0 0.0
    %224 = vmatprep.subr.mxu0 0.0
    %225 = vmatpush1.msra.mxu0 0.0
    %226 = vmatprep.subr.mxu0 0.0
    %227 = vmatpush1.msra.mxu0 0.0
    %228 = vmatprep.subr.mxu0 0.0
    %229 = vmatpush1.msra.mxu0 0.0
    %230 = vmatprep.subr.mxu0 0.0
    %231 = vmatpush1.msra.mxu0 0.0
    %232 = vmatprep.subr.mxu0 0.0
    %233 = vmatpush1.msra.mxu0 0.0
    %234 = vmatprep.subr.mxu0 0.0
    %235 = vmatpush1.msra.mxu0 0.0
    %236 = vmatprep.subr.mxu0 0.0
    %237 = vmatpush1.msra.mxu0 0.0
    %238 = vmatprep.subr.mxu0 0.0
    %239 = vmatpush1.msra.mxu0 0.0
    %240 = vmatprep.subr.mxu0 0.0
    %241 = vmatpush1.msra.mxu0 0.0
    %242 = vmatprep.subr.mxu0 0.0
    %243 = vmatpush1.msra.mxu0 0.0
    %244 = vmatprep.subr.mxu0 0.0
    %245 = vmatpush1.msra.mxu0 0.0
    %246 = vmatprep.subr.mxu0 0.0
    %247 = vmatpush1.msra.mxu0 0.0
    %248 = vmatprep.subr.mxu0 0.0
    %249 = vmatpush1.msra.mxu0 0.0
    %250 = vmatprep.subr.mxu0 0.0
    %251 = vmatpush1.msra.mxu0 %v221
    %252 = vmatprep.subr.mxu0 0.0
    %253 = vmatpush1.msra.mxu0 %v220
    %254 = vmatprep.subr.mxu0 0.0
    %255 = vmatpush2.msra.mxu0 0.0
    %256 = vmatprep.subr.mxu0 0.0
    %257 = vmatpush2.msra.mxu0 0.0
    %258 = vmatprep.subr.mxu0 0.0
    %259 = vmatpush2.msra.mxu0 0.0
    %260 = vmatprep.subr.mxu0 0.0
    %261 = vmatpush2.msra.mxu0 0.0
    %262 = vmatprep.subr.mxu0 0.0
    %263 = vmatpush2.msra.mxu0 0.0
    %264 = vmatprep.subr.mxu0 0.0
    %265 = vmatpush2.msra.mxu0 0.0
    %266 = vmatprep.subr.mxu0 0.0
    %267 = vmatpush2.msra.mxu0 0.0
    %268 = vmatprep.subr.mxu0 0.0
    %269 = vmatpush2.msra.mxu0 0.0
    %270 = vmatprep.subr.mxu0 0.0
    %271 = vmatpush2.msra.mxu0 0.0
    %272 = vmatprep.subr.mxu0 0.0
    %273 = vmatpush2.msra.mxu0 0.0
    %274 = vmatprep.subr.mxu0 0.0
    %275 = vmatpush2.msra.mxu0 0.0
    %276 = vmatprep.subr.mxu0 0.0
    %277 = vmatpush2.msra.mxu0 0.0
    %278 = vmatprep.subr.mxu0 0.0
    %279 = vmatpush2.msra.mxu0 0.0
    %280 = vmatprep.subr.mxu0 0.0
    %281 = vmatpush2.msra.mxu0 0.0
    %282 = vmatprep.subr.mxu0 0.0
    %283 = vmatpush2.msra.mxu0 0.0
    %284 = vmatprep.subr.mxu0 0.0
    %285 = vmatpush2.msra.mxu0 0.0
    %286 = vmatprep.mubr.f32.mxu0 0.0
    %287 = vmatmul.mubr.f32.gmra.mxu0 %v72
    %v288 = vpop.f32.mrf.mxu0
    %v289 = vadd.f32 0.0, %v288
    %v290 = vpop.f32.mrf.mxu0
    %291 = vdwg.mxu0
    %vm292 = vcmp.gt.f32.partialorder %v141, 1e-08
    %v293 = vsel %vm292, %v141, 1.0
    %v294 = vrcp.pop %v293
    %v295 = vmul.f32 %v213, %v294
    %v296 = vsel %vm292, %v295, 0.0
    %v297 = vmul.f32 %v289, %v294
    %v298 = vsel %vm292, %v297, 0.0
    %v299 = vmul.f32 %v296, %v296
    %v300 = vsub.f32 1.0, %v299
    %v301 = vand.u32 2147483647, %v300
    %vm302 = vcmp.gt.f32.partialorder %v301, 1e-08
    %v303 = vsel %vm302, %v300, 1.0
    %v304 = vsub.f32 1.0, %v298
    %v305 = vmul.f32 %v296, %v304
    %v306 = vrcp.pop %v303
    %v307 = vmul.f32 %v305, %v306
    %v308 = vsel %vm302, %v307, 0.0
    %v309 = vsub.f32 %v298, %v299
    %v310 = vmul.f32 %v309, %v306
    %v311 = vsel %vm302, %v310, 0.0
    %v312 = vmax.f32 %v311, -0.99
    %v313 = vmin.f32 %v312, 0.99
    %v314 = vsub.f32 1.0, %v313
    %v315 = vmul.f32 %v314, 0.999
    %v316 = vsub.f32 0.0, %v315
    %v317 = vmax.f32 %v316, %v308
    %v318 = vmin.f32 %v315, %v317
    %v319 = vsub.f32 %v29, %v30
    %v320 = vsub.f32 %v30, %v31
    %v321 = vsub.f32 %v319, %v49
    %v322 = vmul.f32 %v318, %v321
    %v323 = vadd.f32 %v49, %v322
    %v324 = vsub.f32 %v320, %v49
    %v325 = vmul.f32 %v313, %v324
    %v326 = vadd.f32 %v323, %v325
    %v327 = vadd.f32 %v29, %v326
    %v328 = vsub.f32 %v326, %v49
    %v329 = vmul.f32 %v318, %v328
    %v330 = vadd.f32 %v49, %v329
    %v331 = vmul.f32 %v313, %v321
    %v332 = vadd.f32 %v330, %v331
    %v333 = vadd.f32 %v327, %v332
    %v334 = vsub.f32 %v332, %v49
    %v335 = vmul.f32 %v318, %v334
    %v336 = vadd.f32 %v49, %v335
    %v337 = vmul.f32 %v313, %v328
    %v338 = vadd.f32 %v336, %v337
    %v339 = vadd.f32 %v333, %v338
    %v340 = vsub.f32 %v338, %v49
    %v341 = vmul.f32 %v318, %v340
    %v342 = vadd.f32 %v49, %v341
    %v343 = vmul.f32 %v313, %v334
    %v344 = vadd.f32 %v342, %v343
    %v345 = vadd.f32 %v339, %v344
    %v346 = vsub.f32 %v344, %v49
    %v347 = vmul.f32 %v318, %v346
    %v348 = vadd.f32 %v49, %v347
    %v349 = vmul.f32 %v313, %v340
    %v350 = vadd.f32 %v348, %v349
    %v351 = vadd.f32 %v345, %v350
    %v352 = vsub.f32 %v350, %v49
    %v353 = vmul.f32 %v318, %v352
    %v354 = vadd.f32 %v49, %v353
    %v355 = vmul.f32 %v313, %v346
    %v356 = vadd.f32 %v354, %v355
    %v357 = vadd.f32 %v351, %v356
    %v358 = vsub.f32 %v356, %v49
    %v359 = vmul.f32 %v318, %v358
    %v360 = vadd.f32 %v49, %v359
    %v361 = vmul.f32 %v313, %v352
    %v362 = vadd.f32 %v360, %v361
    %v363 = vadd.f32 %v357, %v362
    %v364 = vsub.f32 %v362, %v49
    %v365 = vmul.f32 %v318, %v364
    %v366 = vadd.f32 %v49, %v365
    %v367 = vmul.f32 %v313, %v358
    %v368 = vadd.f32 %v366, %v367
    %v369 = vadd.f32 %v363, %v368
    %v371 = vrot.slane %v333, 7
    %v374 = vrot.slane %v339, 6
    %v377 = vrot.slane %v345, 5
    %v380 = vrot.slane %v351, 4
    %v383 = vrot.slane %v357, 3
    %v386 = vrot.slane %v363, 2
    %v389 = vrot.slane %v369, 1
    %vm391 = vcmask 1040384
    %v392 = vsel %vm391, %v327, %v371
    %vm393 = vcmask 1041408
    %v394 = vsel %vm393, %v392, %v374
    %vm395 = vcmask 1042432
    %v396 = vsel %vm395, %v394, %v377
    %vm397 = vcmask 1043456
    %v398 = vsel %vm397, %v396, %v380
    %vm399 = vcmask 1044480
    %v400 = vsel %vm399, %v398, %v383
    %vm401 = vcmask 1045504
    %v402 = vsel %vm401, %v400, %v386
    %vm403 = vcmask 1046528
    %v404 = vsel %vm403, %v402, %v389
    %405 = vst.msk [vmem:[#allocation5] sm:$0xff] %vm70, %v404
    // Predicated region
    $region10: #{tpu_custom_call.1} parent=1 // pred_check
      _
    $region11: #{tpu_custom_call.1} parent=1 // pred_check_branch
      %407 = sbr.rel (0) target = $region13
    $region12: #{tpu_custom_call.1} parent=1 // pred_region
      %s409 = ssub.s32 128, 128
      %410 = vsyncadd [#allocation4], %s409
      %s412 = sshll.u32 [#allocation5], 4
      %s413 = int_to_ptr.vmem [resolvable:$true] %s412
      %415 = dma.vmem_to_hbm [thread:$0]  %s413, 128, %s1, [#allocation4]
    $region13: #{tpu_custom_call.1} parent=1 // pred_fallthru
      _
    // Predicated region
    $region14: #{tpu_custom_call.1} parent=1 // pred_check
      _
    $region15: #{tpu_custom_call.1} parent=1 // pred_check_branch
      %417 = sbr.rel (0) target = $region17
    $region16: #{tpu_custom_call.1} parent=1 // pred_region
      %418 = dma.done [#allocation4], 128
    $region17: #{tpu_custom_call.1} parent=1 // pred_fallthru
      _
    %419 = vsyncpa [#allocation3], 1
    %420 = vsyncpa [#allocation4], 1

</llo_original>
